<compile_context>
chip_gen: v6e
topology: v6e:2x2x1
jax: 0.10.0
libtpu: 0.0.40
codegen_flags: <defaults>
</compile_context>

<pallas_src>
import jax
import jax.numpy as jnp
from jax.experimental import pallas as pl
from jax.experimental.pallas import tpu as pltpu


def _max_attn_pool_kernel(x_ref, w_ref, max_ref, attn_ref, max_acc, attn_acc):
    # x_ref:   (1, C, tile_hw) block of the input, native dtype
    # w_ref:   (C, 1) conv1x1 weight, float32, resident across grid steps
    # max_ref: (1, C, 1) per-channel global max output
    # attn_ref:(1, C, 1) per-channel attention-pooled output
    # max_acc / attn_acc: (C, 1) float32 VMEM accumulators
    hwi = pl.program_id(1)

    @pl.when(hwi == 0)
    def _():
        max_acc[...] = jnp.full_like(max_acc, -jnp.inf)
        attn_acc[...] = jnp.zeros_like(attn_acc)

    x = x_ref[0]            # (C, tile_hw), native dtype
    w = w_ref[...]          # (C, 1), float32

    # 1x1 conv == per-pixel dot over channels: broadcast-mul + sublane reduce (f32).
    s = jnp.sum(x * w, axis=0, keepdims=True)          # (1, tile_hw) float32
    a = jax.nn.sigmoid(s)                               # (1, tile_hw) float32

    # Attention-weighted spatial sum: lane-axis reduce, f32 accumulation.
    attn_acc[...] += jnp.sum(x * a, axis=1, keepdims=True)      # (C, 1)

    # Global spatial max: lane-axis max, tracked in f32 (exact for f32/bf16 inputs).
    max_acc[...] = jnp.maximum(
        max_acc[...], jnp.max(x, axis=1, keepdims=True).astype(jnp.float32))

    @pl.when(hwi == pl.num_programs(1) - 1)
    def _():
        max_ref[0] = max_acc[...].astype(max_ref.dtype)
        attn_ref[0] = attn_acc[...].astype(attn_ref.dtype)


def _pick_tile_hw(hw: int, c: int, itemsize: int,
                  target_bytes: int = 2 * 1024 * 1024) -> int:
    """Largest HW tile that is a multiple of 128, divides HW, and keeps one
    double-buffered input block ~<= target_bytes (conservative for v5e's 16 MiB
    and v7x's 32 MiB scoped-VMEM defaults). Falls back to the full extent."""
    if hw % 128 != 0:
        return hw  # block dim must equal full array dim in this case
    candidates = [d for d in range(128, hw + 1, 128) if hw % d == 0]
    fitting = [d for d in candidates if c * d * itemsize <= target_bytes]
    if fitting:
        return max(fitting)
    return min(candidates)


def global_max_attn_pool2d(x_nchw: jax.Array, weight: jax.Array) -> jax.Array:
    """x_nchw: (N, C, H, W); weight: (1, C, 1, 1). Returns (N, 2*C, 1, 1)."""
    N, C, H, W = x_nchw.shape
    HW = H * W

    # Contiguous-dim collapse only (no transpose, no extra HBM traffic).
    x = x_nchw.reshape(N, C, HW)
    w = weight.reshape(C, 1).astype(jnp.float32)

    itemsize = jnp.dtype(x.dtype).itemsize
    tile_hw = _pick_tile_hw(HW, C, itemsize)
    num_hw_tiles = HW // tile_hw

    cost = pl.CostEstimate(
        flops=4 * N * C * HW,                 # 2 muls + 2 adds per element (approx)
        transcendentals=N * HW,               # sigmoid per pixel
        bytes_accessed=N * C * HW * itemsize + 2 * N * C * itemsize + C * 4,
    )

    max_out, attn_out = pl.pallas_call(
        _max_attn_pool_kernel,
        out_shape=(
            jax.ShapeDtypeStruct((N, C, 1), x.dtype),
            jax.ShapeDtypeStruct((N, C, 1), x.dtype),
        ),
        grid_spec=pltpu.PrefetchScalarGridSpec(
            num_scalar_prefetch=0,
            grid=(N, num_hw_tiles),
            in_specs=[
                pl.BlockSpec((1, C, tile_hw), lambda b, h: (b, 0, h)),
                pl.BlockSpec((C, 1), lambda b, h: (0, 0)),
            ],
            out_specs=(
                pl.BlockSpec((1, C, 1), lambda b, h: (b, 0, 0)),
                pl.BlockSpec((1, C, 1), lambda b, h: (b, 0, 0)),
            ),
            scratch_shapes=[
                pltpu.VMEM((C, 1), jnp.float32),   # max accumulator
                pltpu.VMEM((C, 1), jnp.float32),   # attn-sum accumulator
            ],
        ),
        compiler_params=pltpu.CompilerParams(
            dimension_semantics=("parallel", "arbitrary"),
        ),
        cost_estimate=cost,
    )(x, w)

    # cat([max, attn], dim=1) then keepdim spatial dims.
    out = jnp.concatenate([max_out, attn_out], axis=1)   # (N, 2C, 1)
    return out.reshape(N, 2 * C, 1, 1)


def _reference(x_nchw, weight):
    # Pure-JAX reference matching the PyTorch forward exactly.
    a = jax.nn.sigmoid(
        jnp.einsum("nchw,c->nhw", x_nchw, weight.reshape(-1))
    )[:, None]                                                    # (N, 1, H, W)
    attn = jnp.sum(x_nchw * a, axis=(-2, -1), keepdims=True)      # (N, C, 1, 1)
    mx = jnp.max(x_nchw, axis=(-2, -1), keepdims=True)            # (N, C, 1, 1)
    return jnp.concatenate([mx, attn], axis=1)                    # (N, 2C, 1, 1)


if __name__ == "__main__":
    N, C, H, W = 2, 4, 16, 16
    key = jax.random.PRNGKey(0)
    kx, kw = jax.random.split(key)
    x = jax.random.normal(kx, (N, C, H, W), dtype=jnp.float32)
    # deterministic conv1x1 weight (kaiming-uniform-ish scale), shape (1, C, 1, 1)
    bound = 1.0 / (C ** 0.5)
    weight = jax.random.uniform(kw, (1, C, 1, 1), jnp.float32, -bound, bound)

    y = global_max_attn_pool2d(x, weight)
    jax.block_until_ready(y)

    y_ref = _reference(x, weight)
    assert y.shape == (N, 2 * C, 1, 1)
    assert jnp.allclose(y, y_ref, atol=1e-5, rtol=1e-5)
    print("KERNEL_OK")
</pallas_src>

<mosaic_0001>
module attributes {stable_mosaic.version = 11 : i64} {
  func.func @_max_attn_pool_kernel(%arg0: i32, %arg1: i32, %arg2: memref<1x4x256xf32, #tpu.memory_space<vmem>>, %arg3: memref<4x1xf32, #tpu.memory_space<vmem>>, %arg4: memref<1x4x1xf32, #tpu.memory_space<vmem>>, %arg5: memref<1x4x1xf32, #tpu.memory_space<vmem>>, %arg6: memref<4x1xf32, #tpu.memory_space<vmem>>, %arg7: memref<4x1xf32, #tpu.memory_space<vmem>>) attributes {dimension_semantics = [#tpu.dimension_semantics<parallel>, #tpu.dimension_semantics<arbitrary>], iteration_bounds = array<i64: 2, 1>, scalar_prefetch = 0 : i64, scratch_operands = 2 : i64, tpu.core_type = #tpu.core_type<tc>, window_params = [{transform_indices = @transform_0, window_bounds = array<i64: 1, 4, 256>}, {pipeline_mode = #tpu.pipeline_mode<synchronous>, transform_indices = @transform_1, window_bounds = array<i64: 4, 1>}, {transform_indices = @transform_2, window_bounds = array<i64: 1, 4, 1>}, {transform_indices = @transform_3, window_bounds = array<i64: 1, 4, 1>}]} {
    %c0_i32 = arith.constant 0 : i32
    %0 = arith.cmpi eq, %arg1, %c0_i32 : i32
    %1 = arith.extui %0 : i1 to i32
    %c0_i32_0 = arith.constant 0 : i32
    %2 = arith.cmpi ne, %1, %c0_i32_0 : i32
    scf.if %2 {
      %cst_18 = arith.constant 0xFF800000 : f32
      %30 = vector.broadcast %cst_18 : f32 to vector<4x1xf32>
      %c0_19 = arith.constant 0 : index
      %c0_20 = arith.constant 0 : index
      %31 = vector.load %arg6[%c0_19, %c0_20] : memref<4x1xf32, #tpu.memory_space<vmem>>, vector<4x1xf32>
      tpu.vector_store %arg6[%c0_19, %c0_20], %30 {strides = array<i32>} : memref<4x1xf32, #tpu.memory_space<vmem>>, vector<4x1xf32>,
      %cst_21 = arith.constant 0.000000e+00 : f32
      %32 = vector.broadcast %cst_21 : f32 to vector<4x1xf32>
      %c0_22 = arith.constant 0 : index
      %c0_23 = arith.constant 0 : index
      %33 = vector.load %arg7[%c0_22, %c0_23] : memref<4x1xf32, #tpu.memory_space<vmem>>, vector<4x1xf32>
      tpu.vector_store %arg7[%c0_22, %c0_23], %32 {strides = array<i32>} : memref<4x1xf32, #tpu.memory_space<vmem>>, vector<4x1xf32>,
    } else {
    }
    %c0 = arith.constant 0 : index
    %c0_1 = arith.constant 0 : index
    %c0_2 = arith.constant 0 : index
    %3 = vector.load %arg2[%c0, %c0_1, %c0_2] : memref<1x4x256xf32, #tpu.memory_space<vmem>>, vector<1x4x256xf32>
    %4 = vector.shape_cast %3 : vector<1x4x256xf32> to vector<4x256xf32>
    %c0_3 = arith.constant 0 : index
    %c0_4 = arith.constant 0 : index
    %5 = vector.load %arg3[%c0_3, %c0_4] : memref<4x1xf32, #tpu.memory_space<vmem>>, vector<4x1xf32>
    %6 = vector.broadcast %5 : vector<4x1xf32> to vector<4x256xf32>
    %7 = arith.mulf %4, %6 : vector<4x256xf32>
    %cst = arith.constant dense<0.000000e+00> : vector<256xf32>
    %8 = vector.multi_reduction <add>, %7, %cst [0] : vector<4x256xf32> to vector<256xf32>
    %9 = vector.shape_cast %8 : vector<256xf32> to vector<1x256xf32>
    %10 = arith.negf %9 : vector<1x256xf32>
    %11 = math.exp %10 : vector<1x256xf32>
    %cst_5 = arith.constant 1.000000e+00 : f32
    %12 = vector.broadcast %cst_5 : f32 to vector<1x256xf32>
    %13 = arith.addf %12, %11 : vector<1x256xf32>
    %14 = arith.divf %12, %13 : vector<1x256xf32>
    %c0_6 = arith.constant 0 : index
    %c0_7 = arith.constant 0 : index
    %15 = vector.load %arg7[%c0_6, %c0_7] : memref<4x1xf32, #tpu.memory_space<vmem>>, vector<4x1xf32>
    %16 = vector.broadcast %14 : vector<1x256xf32> to vector<4x256xf32>
    %17 = arith.mulf %4, %16 : vector<4x256xf32>
    %cst_8 = arith.constant dense<0.000000e+00> : vector<4xf32>
    %18 = vector.multi_reduction <add>, %17, %cst_8 [1] : vector<4x256xf32> to vector<4xf32>
    %19 = vector.shape_cast %18 : vector<4xf32> to vector<4x1xf32>
    %20 = arith.addf %15, %19 : vector<4x1xf32>
    %c0_9 = arith.constant 0 : index
    %c0_10 = arith.constant 0 : index
    %21 = vector.load %arg7[%c0_9, %c0_10] : memref<4x1xf32, #tpu.memory_space<vmem>>, vector<4x1xf32>
    tpu.vector_store %arg7[%c0_9, %c0_10], %20 {strides = array<i32>} : memref<4x1xf32, #tpu.memory_space<vmem>>, vector<4x1xf32>,
    %c0_11 = arith.constant 0 : index
    %c0_12 = arith.constant 0 : index
    %22 = vector.load %arg6[%c0_11, %c0_12] : memref<4x1xf32, #tpu.memory_space<vmem>>, vector<4x1xf32>
    %cst_13 = arith.constant dense<0xFF800000> : vector<4xf32>
    %23 = vector.multi_reduction <maximumf>, %4, %cst_13 [1] : vector<4x256xf32> to vector<4xf32>
    %24 = vector.shape_cast %23 : vector<4xf32> to vector<4x1xf32>
    %25 = arith.maximumf %22, %24 : vector<4x1xf32>
    %c0_14 = arith.constant 0 : index
    %c0_15 = arith.constant 0 : index
    %26 = vector.load %arg6[%c0_14, %c0_15] : memref<4x1xf32, #tpu.memory_space<vmem>>, vector<4x1xf32>
    tpu.vector_store %arg6[%c0_14, %c0_15], %25 {strides = array<i32>} : memref<4x1xf32, #tpu.memory_space<vmem>>, vector<4x1xf32>,
    %c0_i32_16 = arith.constant 0 : i32
    %27 = arith.cmpi eq, %arg1, %c0_i32_16 : i32
    %28 = arith.extui %27 : i1 to i32
    %c0_i32_17 = arith.constant 0 : i32
    %29 = arith.cmpi ne, %28, %c0_i32_17 : i32
    scf.if %29 {
      %c0_18 = arith.constant 0 : index
      %c0_19 = arith.constant 0 : index
      %30 = vector.load %arg6[%c0_18, %c0_19] : memref<4x1xf32, #tpu.memory_space<vmem>>, vector<4x1xf32>
      %c0_20 = arith.constant 0 : index
      %c0_21 = arith.constant 0 : index
      %c0_22 = arith.constant 0 : index
      %31 = vector.load %arg4[%c0_20, %c0_21, %c0_22] : memref<1x4x1xf32, #tpu.memory_space<vmem>>, vector<1x4x1xf32>
      %32 = vector.shape_cast %31 : vector<1x4x1xf32> to vector<4x1xf32>
      %33 = vector.shape_cast %30 : vector<4x1xf32> to vector<1x4x1xf32>
      tpu.vector_store %arg4[%c0_20, %c0_21, %c0_22], %33 {strides = array<i32>} : memref<1x4x1xf32, #tpu.memory_space<vmem>>, vector<1x4x1xf32>,
      %c0_23 = arith.constant 0 : index
      %c0_24 = arith.constant 0 : index
      %34 = vector.load %arg7[%c0_23, %c0_24] : memref<4x1xf32, #tpu.memory_space<vmem>>, vector<4x1xf32>
      %c0_25 = arith.constant 0 : index
      %c0_26 = arith.constant 0 : index
      %c0_27 = arith.constant 0 : index
      %35 = vector.load %arg5[%c0_25, %c0_26, %c0_27] : memref<1x4x1xf32, #tpu.memory_space<vmem>>, vector<1x4x1xf32>
      %36 = vector.shape_cast %35 : vector<1x4x1xf32> to vector<4x1xf32>
      %37 = vector.shape_cast %34 : vector<4x1xf32> to vector<1x4x1xf32>
      tpu.vector_store %arg5[%c0_25, %c0_26, %c0_27], %37 {strides = array<i32>} : memref<1x4x1xf32, #tpu.memory_space<vmem>>, vector<1x4x1xf32>,
    } else {
    }
    return
  }
  func.func @transform_0(%arg0: i32, %arg1: i32) -> (i32, i32, i32) {
    %c0_i32 = arith.constant 0 : i32
    %c0_i32_0 = arith.constant 0 : i32
    return %arg0, %c0_i32, %arg1 : i32, i32, i32
  }
  func.func @transform_1(%arg0: i32, %arg1: i32) -> (i32, i32) {
    %c0_i32 = arith.constant 0 : i32
    %c0_i32_0 = arith.constant 0 : i32
    %c0_i32_1 = arith.constant 0 : i32
    return %c0_i32, %c0_i32_0 : i32, i32
  }
  func.func @transform_2(%arg0: i32, %arg1: i32) -> (i32, i32, i32) {
    %c0_i32 = arith.constant 0 : i32
    %c0_i32_0 = arith.constant 0 : i32
    %c0_i32_1 = arith.constant 0 : i32
    return %arg0, %c0_i32, %c0_i32_0 : i32, i32, i32
  }
  func.func @transform_3(%arg0: i32, %arg1: i32) -> (i32, i32, i32) {
    %c0_i32 = arith.constant 0 : i32
    %c0_i32_0 = arith.constant 0 : i32
    %c0_i32_1 = arith.constant 0 : i32
    return %arg0, %c0_i32, %c0_i32_0 : i32, i32, i32
  }
}

</mosaic_0001>

<llo_original>
// kernel: tpu_custom_call.1
$region0: #{tpu_custom_call.1}
  #allocation0 [shape = 'u32[]', space=smem, size = 0x4, offset = 0x4, fixed_abs, tag = 'smem constant byte address 0x4 - core index']
  #allocation1 [shape = 'u32[144,128]{1,0:T(1,128)}', space=vmem, size = 0x12000, scoped, tag = 'internal scratch']
  #allocation2 [shape = 'f32[4,1]{1,0:T(4,128)}', space=vmem, size = 0x800, scoped, tag = 'scratch operand']
  #allocation3 [shape = 'f32[4,1]{1,0:T(4,128)}', space=vmem, size = 0x800, scoped, tag = 'scratch operand']
  %s0 = inlined_call_operand.hbm [shape: f32[2,4,256], index: 0, kind: input, shape index: {}]
  %s1 = inlined_call_operand.vmem [shape: f32[4,1], index: 1, kind: input, shape index: {}]
  %s2 = inlined_call_operand.vmem [shape: f32[2,4,1], index: 2, kind: output, shape index: {0}]
  %s3 = inlined_call_operand.vmem [shape: f32[2,4,1], index: 3, kind: output, shape index: {1}]
  %4 = xla_tuple %s2, %s3
  %s5 = sld [smem:[#allocation0]]
  $region61: #{tpu_custom_call.1} parent=0
    _
  %s7 = ssub.s32 1, %s5
  %s8 = scalar_select 0, %s7, %s5
  $region1: #{tpu_custom_call.1} parent=0
    #allocation4 [shape = 'u8[8192]{0}', space=vmem, size = 0x2000, scoped, tag = 'input window, operand 0']
    #allocation5 [shape = 's32[2]{0}', space=sflag, size = 0x8, scoped, tag = 'scoped memory for tpu_custom_call.1']
    %9 = vsyncpa [#allocation5], 0
    %s10 = scalar_lea.sflag [#allocation5], 1
    %11 = vsyncpa %s10, 0
    loop: start=0, step=1, limit=4
    $region2: #{tpu_custom_call.1} parent=1 // loop_pre_header
      _
    $region3: #{tpu_custom_call.1} parent=1 // loop_header
      %s13 = sphi 0, %s17
      %p14 = scmp.ge.s32.totalorder %s13, 4
      %s20 = sphi 0, %s32
      %s21 = sphi 0, %s28
      %s22 = sphi 0, %s20
      %s23 = sphi 0, %s21
      %s24 = sphi 0, %s22
      %s25 = sphi 0, %s23
      %s37 = sphi 0, %s39
      %s40 = sphi 0, %s37
      %s41 = sphi 0, %s40
      %s57 = sphi 0, %s41
      %s61 = sphi 0, %s61
      %s63 = sphi 0, %s61
      %s64 = sphi 0, %s63
      %s78 = sphi 0, %s64
      %s84 = sphi 0, %s86
      %s87 = sphi 0, %s84
      %s88 = sphi 0, %s87
      %s104 = sphi 0, %s88
      %s110 = sphi 0, %s112
      %s113 = sphi 0, %s110
      %s114 = sphi 0, %s113
      %s130 = sphi 0, %s114
    $region4: #{tpu_custom_call.1} parent=1 // loop_header_branch
      %16 = sbr.rel (%p14) target = $region8
    $region5: #{tpu_custom_call.1} parent=1 // loop_body
      %s18 = ssub.s32 %s13, 1
      %s19 = ssub.s32 %s13, 2
      %s26 = sadd.s32 1, %s21
      %p27 = scmp.ge.s32.totalorder %s26, 1
      %s28 = scalar_select %p27, 0, %s26
      %s29 = sadd.s32 1, %s20
      %s30 = scalar_select %p27, %s29, %s20
      %p31 = scmp.ge.s32.totalorder %s30, 2
      %s32 = scalar_select %p31, 0, %s30
      %s33 = ssub.s32 %s20, %s32
      %s34 = ssub.s32 %s21, %s28
      %s35 = sor.u32 %s33, %s34
      %p36 = scmp.eq.s32.totalorder %s35, 0
      %s38 = sadd.s32 %s37, 1
      %s39 = scalar_select %p36, %s37, %s38
      %p42 = pneg %p36
      %p43 = scmp.eq.s32.totalorder %s13, 1
      %p44 = por %p42, %p43
      %p45 = scmp.ne.s32.totalorder %s37, %s40
      %p46 = scmp.eq.s32.totalorder %s13, 0
      %p47 = por %p45, %p46
      %p48 = scmp.ne.s32.totalorder %s37, %s40
      %p49 = scmp.eq.s32.totalorder %s18, 1
      %p50 = por %p48, %p49
      %p51 = scmp.ne.s32.totalorder %s40, %s41
      %p52 = scmp.eq.s32.totalorder %s18, 0
      %p53 = por %p51, %p52
      %p54 = scmp.ne.s32.totalorder %s40, %s41
      %p55 = scmp.eq.s32.totalorder %s19, 1
      %p56 = por %p54, %p55
      %p58 = scmp.ne.s32.totalorder %s41, %s57
      %p59 = scmp.eq.s32.totalorder %s19, 0
      %p60 = por %p58, %p59
      %s62 = sadd.s32 %s61, 1
      %p65 = scmp.eq.s32.totalorder %s13, 1
      %p66 = scmp.ne.s32.totalorder %s61, %s63
      %p67 = scmp.eq.s32.totalorder %s13, 0
      %p68 = por %p66, %p67
      %p69 = scmp.ne.s32.totalorder %s61, %s63
      %p70 = scmp.eq.s32.totalorder %s18, 1
      %p71 = por %p69, %p70
      %p72 = scmp.ne.s32.totalorder %s63, %s64
      %p73 = scmp.eq.s32.totalorder %s18, 0
      %p74 = por %p72, %p73
      %p75 = scmp.ne.s32.totalorder %s63, %s64
      %p76 = scmp.eq.s32.totalorder %s19, 1
      %p77 = por %p75, %p76
      %p79 = scmp.ne.s32.totalorder %s64, %s78
      %p80 = scmp.eq.s32.totalorder %s19, 0
      %p81 = por %p79, %p80
      %s82 = ssub.s32 %s20, %s32
      %p83 = scmp.eq.s32.totalorder %s82, 0
      %s85 = sadd.s32 %s84, 1
      %s86 = scalar_select %p83, %s84, %s85
      %p89 = pneg %p83
      %p90 = scmp.eq.s32.totalorder %s13, 1
      %p91 = por %p89, %p90
      %p92 = scmp.ne.s32.totalorder %s84, %s87
      %p93 = scmp.eq.s32.totalorder %s13, 0
      %p94 = por %p92, %p93
      %p95 = scmp.ne.s32.totalorder %s84, %s87
      %p96 = scmp.eq.s32.totalorder %s18, 1
      %p97 = por %p95, %p96
      %p98 = scmp.ne.s32.totalorder %s87, %s88
      %p99 = scmp.eq.s32.totalorder %s18, 0
      %p100 = por %p98, %p99
      %p101 = scmp.ne.s32.totalorder %s87, %s88
      %p102 = scmp.eq.s32.totalorder %s19, 1
      %p103 = por %p101, %p102
      %p105 = scmp.ne.s32.totalorder %s88, %s104
      %p106 = scmp.eq.s32.totalorder %s19, 0
      %p107 = por %p105, %p106
      %s108 = ssub.s32 %s20, %s32
      %p109 = scmp.eq.s32.totalorder %s108, 0
      %s111 = sadd.s32 %s110, 1
      %s112 = scalar_select %p109, %s110, %s111
      %p115 = pneg %p109
      %p116 = scmp.eq.s32.totalorder %s13, 1
      %p117 = por %p115, %p116
      %p118 = scmp.ne.s32.totalorder %s110, %s113
      %p119 = scmp.eq.s32.totalorder %s13, 0
      %p120 = por %p118, %p119
      %p121 = scmp.ne.s32.totalorder %s110, %s113
      %p122 = scmp.eq.s32.totalorder %s18, 1
      %p123 = por %p121, %p122
      %p124 = scmp.ne.s32.totalorder %s113, %s114
      %p125 = scmp.eq.s32.totalorder %s18, 0
      %p126 = por %p124, %p125
      %p127 = scmp.ne.s32.totalorder %s113, %s114
      %p128 = scmp.eq.s32.totalorder %s19, 1
      %p129 = por %p127, %p128
      %p131 = scmp.ne.s32.totalorder %s114, %s130
      %p132 = scmp.eq.s32.totalorder %s19, 0
      %p133 = por %p131, %p132
      %p134 = scmp.le.s32.totalorder 1, %s13
      %p135 = scmp.lt.s32.totalorder %s13, 3
      %p136 = pnand %p134, %p135
      %p137 = pneg %p136
      // Predicated region
      $region9: #{tpu_custom_call.1} parent=5 // pred_check
        _
      $region10: #{tpu_custom_call.1} parent=5 // pred_check_branch
        %139 = sbr.rel (%p136) target = $region12
      $region11: #{tpu_custom_call.1} parent=5 // pred_region
        %s140 = ssub.s32 %s13, 1
        // Predicated region
        $region13: #{tpu_custom_call.1} parent=11 // pred_check
          %p141 = pneg %p74
        $region14: #{tpu_custom_call.1} parent=11 // pred_check_branch
          %143 = sbr.rel (%p141) target = $region16
        $region15: #{tpu_custom_call.1} parent=11 // pred_region
          _
        $region16: #{tpu_custom_call.1} parent=11 // pred_fallthru
          _
      $region12: #{tpu_custom_call.1} parent=5 // pred_fallthru
        _
      %p144 = scmp.lt.s32.totalorder %s13, 2
      // Predicated region
      $region17: #{tpu_custom_call.1} parent=5 // pred_check
        %p145 = pneg %p144
      $region18: #{tpu_custom_call.1} parent=5 // pred_check_branch
        %147 = sbr.rel (%p145) target = $region20
      $region19: #{tpu_custom_call.1} parent=5 // pred_region
        // Predicated region
        $region21: #{tpu_custom_call.1} parent=19 // pred_check
          %p148 = pneg %p47
        $region22: #{tpu_custom_call.1} parent=19 // pred_check_branch
          %150 = sbr.rel (%p148) target = $region24
        $region23: #{tpu_custom_call.1} parent=19 // pred_region
          %s151 = sand.u32 %s37, 1
          %s152 = scalar_lea.sflag [#allocation5], %s151
          %s153 = sand.u32 %s37, 1
          %s154 = smul.addr %s153, 8
          %s155 = scalar_lea.vmem [#allocation4], %s154
          %s156 = smul.u32 2, %s21
          %s158 = ssub.s32 128, 128
          %159 = vsyncadd %s152, %s158
          %s160 = smul.addr %s20, 2
          %s161 = sadd.s32 %s156, %s160
          %s162 = smul.addr %s161, 64
          %s163 = scalar_lea.hbm %s0, %s162
          %s165 = sshll.u32 %s155, 4
          %s166 = int_to_ptr.vmem [resolvable:$true] %s165
          %168 = dma.hbm_to_vmem [thread:$0]  %s163, 128, %s166, %s152
        $region24: #{tpu_custom_call.1} parent=19 // pred_fallthru
          _
      $region20: #{tpu_custom_call.1} parent=5 // pred_fallthru
        _
      %p169 = scmp.le.s32.totalorder 1, %s13
      %p170 = scmp.lt.s32.totalorder %s13, 3
      %p171 = pnand %p169, %p170
      %p172 = pneg %p171
      // Predicated region
      $region25: #{tpu_custom_call.1} parent=5 // pred_check
        _
      $region26: #{tpu_custom_call.1} parent=5 // pred_check_branch
        %174 = sbr.rel (%p171) target = $region28
      $region27: #{tpu_custom_call.1} parent=5 // pred_region
        %s175 = ssub.s32 %s13, 1
        %s176 = sand.u32 %s40, 1
        %s177 = scalar_lea.sflag [#allocation5], %s176
        %s178 = sand.u32 %s40, 1
        %s179 = smul.addr %s178, 8
        %s180 = scalar_lea.vmem [#allocation4], %s179
        // Predicated region
        $region29: #{tpu_custom_call.1} parent=27 // pred_check
          %p181 = pneg %p53
        $region30: #{tpu_custom_call.1} parent=27 // pred_check_branch
          %183 = sbr.rel (%p181) target = $region32
        $region31: #{tpu_custom_call.1} parent=27 // pred_region
          %184 = dma.done %s177, 128
        $region32: #{tpu_custom_call.1} parent=27 // pred_fallthru
          _
        %s185 = sand.u32 %s40, 1
        %s186 = scalar_lea.sflag [#allocation5], %s185
        %s187 = sand.u32 %s40, 1
        %s188 = smul.addr %s187, 8
        %s189 = scalar_lea.vmem [#allocation4], %s188
        %p190 = pneg %p53
        %p191 = pneg %p50
        %p192 = pneg %p74
        %p193 = pneg %p71
        %p194 = pneg %p100
        %p195 = pneg %p97
        %p196 = scmp.lt.s32.totalorder %s22, 1
        %s197 = scalar_select %p196, %s22, 1
        %s198 = smul.addr %s197, 4
        %s199 = scalar_lea.vmem %s2, %s198
        %p200 = pneg %p126
        %p201 = pneg %p123
        %p202 = scmp.lt.s32.totalorder %s22, 1
        %s203 = scalar_select %p202, %s22, 1
        %s204 = smul.addr %s203, 4
        %s205 = scalar_lea.vmem %s3, %s204
        %s206 = smul.u32 2, %s23
        %p207 = scmp.lt.s32.totalorder %s22, 1
        %s208 = scalar_select %p207, %s22, 1
        %s209 = smul.addr %s208, 4
        %s210 = scalar_lea.vmem %s2, %s209
        %p211 = scmp.lt.s32.totalorder %s22, 1
        %s212 = scalar_select %p211, %s22, 1
        %s213 = smul.addr %s212, 4
        %s214 = scalar_lea.vmem %s3, %s213
        %p215 = scmp.eq.s32.totalorder %s23, 0
        // Predicated region
        $region33: #{tpu_custom_call.1} parent=27 // pred_check
          %p216 = pneg %p215
        $region34: #{tpu_custom_call.1} parent=27 // pred_check_branch
          %218 = sbr.rel (%p216) target = $region36
        $region35: #{tpu_custom_call.1} parent=27 // pred_region
          %vm219 = vcmask 3072
          %220 = vst.msk [vmem:[#allocation2] sm:$0xf] %vm219, -inf
          %221 = vst.msk [vmem:[#allocation3] sm:$0xf] %vm219, 0.0
        $region36: #{tpu_custom_call.1} parent=27 // pred_fallthru
          _
        %v222 = vld [vmem:[%s180] sm:$0xff]
        %v223 = vld [vmem:[%s1] sm:$0xf]
        %225 = vset.pattern.permute.xlu0 0
        %226 = vperm.xlu0 %225, %v223
        %v227 = vpop.permute.xlu0 %226
        %v229 = vunpack.c.l.s4 839922192
        %v230 = vunpack.c.0.s8 %v229
        %v231 = vlaneseq
        %v232 = vshrl.u32 %v231, 7
        %v233 = vsub.s32 %v230, %v232
        %v234 = vrot.slane %v227, %v233
        %v236 = vmul.f32 %v222, %v234
        %v238 = vcombine.high %v236, %v236
        %vm240 = vcmask 1043456
        %v241 = vsel %vm240, %v236, 0.0
        %v242 = vrot.slane %v241, 4
        %v243 = vadd.f32 %v241, %v242
        %v244 = vrot.slane %v243, 2
        %v245 = vadd.f32 %v243, %v244
        %v246 = vrot.slane %v245, 1
        %v247 = vadd.f32 %v245, %v246
        %v248 = vsel %vm240, %v238, 0.0
        %v249 = vrot.slane %v248, 4
        %v250 = vadd.f32 %v248, %v249
        %v251 = vrot.slane %v250, 2
        %v252 = vadd.f32 %v250, %v251
        %v253 = vrot.slane %v252, 1
        %v254 = vadd.f32 %v252, %v253
        %v255 = vxor.u32 %v247, 2147483648
        %v256 = vxor.u32 %v254, 2147483648
        %v257 = vmul.f32 %v255, 1.442695
        %v258 = vpow.pop %v257
        %v259 = vmul.f32 %v256, 1.442695
        %v260 = vpow.pop %v259
        %v261 = vadd.f32 %v258, 1.0
        %v262 = vadd.f32 %v260, 1.0
        %v263 = vrcp.pop %v261
        %v264 = vmul.f32 1.0, %v263
        %v265 = vrcp.pop %v262
        %v266 = vmul.f32 1.0, %v265
        %v267 = vld [vmem:[#allocation3] sm:$0xf]
        %v270 = vcombine.low %v264, %v266
        %v272 = vmul.f32 %v222, %v270
        %v274 = vcombine.high %v272, %v272
        %v276 = vsel %vm240, %v272, 0.0
        %v277 = vsel %vm240, %v274, 0.0
        %v278 = vadd.f32 %v276, %v277
        %279 = vadd.xlane.f32.xlu0 %v278
        %v280 = vpop.xlane.xlu0 %279
        %v281 = vadd.f32 %v267, %v280
        %vm282 = vcmask 3072
        %283 = vst.msk [vmem:[#allocation3] sm:$0xf] %vm282, %v281
        %v284 = vld [vmem:[#allocation2] sm:$0xf]
        %v286 = vcombine.high %v222, %v222
        %v288 = vsel %vm240, %v222, -inf
        %v289 = vsel %vm240, %v286, -inf
        %v290 = vmax.f32 %v288, %v289
        %291 = vmax.xlane.f32.xlu0 %v290
        %v292 = vpop.xlane.xlu0 %291
        %v293 = vmax.f32 %v284, %v292
        %294 = vst.msk [vmem:[#allocation2] sm:$0xf] %vm282, %v293
        // Predicated region
        $region37: #{tpu_custom_call.1} parent=27 // pred_check
          %p295 = pneg %p215
        $region38: #{tpu_custom_call.1} parent=27 // pred_check_branch
          %297 = sbr.rel (%p295) target = $region40
        $region39: #{tpu_custom_call.1} parent=27 // pred_region
          %v298 = vld [vmem:[#allocation2] sm:$0xf]
          %299 = vst.msk [vmem:[%s210] sm:$0xf] %vm282, %v298
          %v300 = vld [vmem:[#allocation3] sm:$0xf]
          %301 = vst.msk [vmem:[%s214] sm:$0xf] %vm282, %v300
        $region40: #{tpu_custom_call.1} parent=27 // pred_fallthru
          _
        %p302 = scmp.lt.s32.totalorder %s22, 1
        %s303 = scalar_select %p302, %s22, 1
        %s304 = smul.addr %s303, 4
        %s305 = scalar_lea.vmem %s2, %s304
        %p306 = scmp.lt.s32.totalorder %s22, 1
        %s307 = scalar_select %p306, %s22, 1
        %s308 = smul.addr %s307, 4
        %s309 = scalar_lea.vmem %s3, %s308
        // Predicated region
        $region41: #{tpu_custom_call.1} parent=27 // pred_check
          %p310 = pneg %p97
        $region42: #{tpu_custom_call.1} parent=27 // pred_check_branch
          %312 = sbr.rel (%p310) target = $region44
        $region43: #{tpu_custom_call.1} parent=27 // pred_region
          _
        $region44: #{tpu_custom_call.1} parent=27 // pred_fallthru
          _
        // Predicated region
        $region45: #{tpu_custom_call.1} parent=27 // pred_check
          %p313 = pneg %p123
        $region46: #{tpu_custom_call.1} parent=27 // pred_check_branch
          %315 = sbr.rel (%p313) target = $region48
        $region47: #{tpu_custom_call.1} parent=27 // pred_region
          _
        $region48: #{tpu_custom_call.1} parent=27 // pred_fallthru
          _
      $region28: #{tpu_custom_call.1} parent=5 // pred_fallthru
        _
      %p316 = scmp.le.s32.totalorder 2, %s13
      // Predicated region
      $region49: #{tpu_custom_call.1} parent=5 // pred_check
        %p317 = pneg %p316
      $region50: #{tpu_custom_call.1} parent=5 // pred_check_branch
        %319 = sbr.rel (%p317) target = $region52
      $region51: #{tpu_custom_call.1} parent=5 // pred_region
        %s320 = ssub.s32 %s13, 2
        // Predicated region
        $region53: #{tpu_custom_call.1} parent=51 // pred_check
          %p321 = pneg %p103
        $region54: #{tpu_custom_call.1} parent=51 // pred_check_branch
          %323 = sbr.rel (%p321) target = $region56
        $region55: #{tpu_custom_call.1} parent=51 // pred_region
          %p324 = scmp.lt.s32.totalorder %s24, 1
          %s325 = scalar_select %p324, %s24, 1
          %s326 = smul.addr %s325, 4
          %s327 = scalar_lea.vmem %s2, %s326
        $region56: #{tpu_custom_call.1} parent=51 // pred_fallthru
          _
        // Predicated region
        $region57: #{tpu_custom_call.1} parent=51 // pred_check
          %p328 = pneg %p129
        $region58: #{tpu_custom_call.1} parent=51 // pred_check_branch
          %330 = sbr.rel (%p328) target = $region60
        $region59: #{tpu_custom_call.1} parent=51 // pred_region
          %p331 = scmp.lt.s32.totalorder %s24, 1
          %s332 = scalar_select %p331, %s24, 1
          %s333 = smul.addr %s332, 4
          %s334 = scalar_lea.vmem %s3, %s333
        $region60: #{tpu_custom_call.1} parent=51 // pred_fallthru
          _
      $region52: #{tpu_custom_call.1} parent=5 // pred_fallthru
        _
    $region6: #{tpu_custom_call.1} parent=1 // loop_footer
      %s17 = sadd.s32 1, %s13
    $region7: #{tpu_custom_call.1} parent=1 // loop_footer_branch
      %12 = sbr.rel target = $region3
    $region8: #{tpu_custom_call.1} parent=1 // loop_exit
      _
    %335 = vsyncpa [#allocation5], 1
    %s336 = scalar_lea.sflag [#allocation5], 1
    %337 = vsyncpa %s336, 1

</llo_original>
